<compile_context>
chip_gen: v7x
topology: tpu7x:2x2x1
jax: 0.10.0
libtpu: 0.0.40
codegen_flags: <defaults>
</compile_context>

<pallas_src>
import functools

import jax
import jax.numpy as jnp
from jax.experimental import pallas as pl
from jax.experimental.pallas import tpu as pltpu

BN_EPS = 1e-5
LN_EPS = 1e-5


def _gcn_matmul_kernel(x_ref, adj_ref, w_ref, out_ref, psum_ref, psumsq_ref):
    """One batch slice: out = D^-1/2 A D^-1/2 x W, plus partial BN statistics."""
    x = x_ref[0]        # (N, Fin)
    adj = adj_ref[0]    # (N, N)
    w = w_ref[...]      # (Fin, Fout)

    fin = x.shape[-1]
    fout = w.shape[-1]

    # Degree normalization folded into matmul operands (no (N, N) temporary).
    deg = jnp.sum(adj, axis=-1, keepdims=True)                # (N, 1)
    d_inv_sqrt = jnp.where(deg > 0, jax.lax.rsqrt(deg), 0.0)  # (N, 1)

    if fin <= fout:
        # (adj @ (d*x)) @ W : cheaper when Fin <= Fout.
        h = jnp.dot(adj, x * d_inv_sqrt, preferred_element_type=jnp.float32)
        h = h * d_inv_sqrt                                    # (N, Fin)
        out = jnp.dot(h, w, preferred_element_type=jnp.float32)
    else:
        # adj @ (d * (x @ W)) : cheaper when Fin > Fout.
        h = jnp.dot(x, w, preferred_element_type=jnp.float32)  # (N, Fout)
        out = jnp.dot(adj, h * d_inv_sqrt, preferred_element_type=jnp.float32)
        out = out * d_inv_sqrt                                  # (N, Fout)

    out_ref[0] = out

    # Per-batch partial sums for global BatchNorm statistics.
    psum_ref[0] = jnp.sum(out, axis=0, keepdims=True)          # (1, Fout)
    psumsq_ref[0] = jnp.sum(out * out, axis=0, keepdims=True)  # (1, Fout)


def _gcn_norm_kernel(inv_count, pre_ref, psum_ref, psumsq_ref,
                     bn_g_ref, bn_b_ref, ln_g_ref, ln_b_ref, o_ref):
    """One batch slice: BatchNorm1d (global batch stats) + LayerNorm."""
    # Combine tiny (B, 1, Fout) partials into global batch statistics.
    mean = jnp.sum(psum_ref[...], axis=0) * inv_count          # (1, Fout)
    ex2 = jnp.sum(psumsq_ref[...], axis=0) * inv_count         # (1, Fout)
    var = ex2 - mean * mean                                    # biased variance

    out = pre_ref[0]                                           # (N, Fout)
    bn = (out - mean) * jax.lax.rsqrt(var + BN_EPS)
    bn = bn * bn_g_ref[...] + bn_b_ref[...]

    mu = jnp.mean(bn, axis=-1, keepdims=True)                  # (N, 1)
    v = jnp.mean((bn - mu) ** 2, axis=-1, keepdims=True)
    ln = (bn - mu) * jax.lax.rsqrt(v + LN_EPS)
    ln = ln * ln_g_ref[...] + ln_b_ref[...]

    # Dropout: identity (see TODO at top of file).
    o_ref[0] = ln.astype(o_ref.dtype)


def gcn_layer(x, adj, weight, bn_gamma, bn_beta, ln_gamma, ln_beta):
    """x: (B,N,Fin), adj: (B,N,N), weight: (Fin,Fout), norm params: (1,Fout)."""
    B, N, Fin = x.shape
    Fout = weight.shape[1]

    parallel = pltpu.CompilerParams(dimension_semantics=("parallel",))

    # ---- pass 1: normalized-adjacency matmul + partial BN sums, per batch ----
    pre, psum, psumsq = pl.pallas_call(
        _gcn_matmul_kernel,
        grid=(B,),
        in_specs=[
            pl.BlockSpec((1, N, Fin), lambda b: (b, 0, 0)),
            pl.BlockSpec((1, N, N), lambda b: (b, 0, 0)),
            pl.BlockSpec((Fin, Fout), lambda b: (0, 0)),
        ],
        out_specs=[
            pl.BlockSpec((1, N, Fout), lambda b: (b, 0, 0)),
            pl.BlockSpec((1, 1, Fout), lambda b: (b, 0, 0)),
            pl.BlockSpec((1, 1, Fout), lambda b: (b, 0, 0)),
        ],
        out_shape=[
            jax.ShapeDtypeStruct((B, N, Fout), jnp.float32),
            jax.ShapeDtypeStruct((B, 1, Fout), jnp.float32),
            jax.ShapeDtypeStruct((B, 1, Fout), jnp.float32),
        ],
        compiler_params=parallel,
    )(x, adj, weight)

    # ---- pass 2: BN (global stats) + LN, per batch ---------------------------
    out = pl.pallas_call(
        functools.partial(_gcn_norm_kernel, 1.0 / float(B * N)),
        grid=(B,),
        in_specs=[
            pl.BlockSpec((1, N, Fout), lambda b: (b, 0, 0)),
            pl.BlockSpec((B, 1, Fout), lambda b: (0, 0, 0)),
            pl.BlockSpec((B, 1, Fout), lambda b: (0, 0, 0)),
            pl.BlockSpec((1, Fout), lambda b: (0, 0)),
            pl.BlockSpec((1, Fout), lambda b: (0, 0)),
            pl.BlockSpec((1, Fout), lambda b: (0, 0)),
            pl.BlockSpec((1, Fout), lambda b: (0, 0)),
        ],
        out_specs=pl.BlockSpec((1, N, Fout), lambda b: (b, 0, 0)),
        out_shape=jax.ShapeDtypeStruct((B, N, Fout), jnp.float32),
        compiler_params=parallel,
    )(pre, psum, psumsq, bn_gamma, bn_beta, ln_gamma, ln_beta)

    return out


def _reference(x, adj, weight, bn_gamma, bn_beta, ln_gamma, ln_beta):
    deg = jnp.sum(adj, axis=-1, keepdims=True)
    dis = jnp.power(deg, -0.5)
    dis = jnp.where(jnp.isinf(dis), 0.0, dis)
    na = adj * dis * jnp.swapaxes(dis, -1, -2)
    out = jnp.einsum('bnm,bmf->bnf', na, x) @ weight
    B, N, Fo = out.shape
    flat = out.reshape(-1, Fo)
    mean = flat.mean(0, keepdims=True)
    var = ((flat - mean) ** 2).mean(0, keepdims=True)
    bn = ((flat - mean) / jnp.sqrt(var + BN_EPS) * bn_gamma + bn_beta).reshape(B, N, Fo)
    mu = bn.mean(-1, keepdims=True)
    v = ((bn - mu) ** 2).mean(-1, keepdims=True)
    return (bn - mu) / jnp.sqrt(v + LN_EPS) * ln_gamma + ln_beta


if __name__ == "__main__":
    B, N, FIN, FOUT = 2, 16, 8, 32

    key = jax.random.PRNGKey(0)
    kx, ka, kw = jax.random.split(key, 3)

    x = jax.random.normal(kx, (B, N, FIN), dtype=jnp.float32)

    # Random symmetric adjacency with self-loops (all-positive degrees).
    a = jax.random.uniform(ka, (B, N, N), dtype=jnp.float32)
    adj = (a + jnp.swapaxes(a, -1, -2)) * 0.5 + jnp.eye(N, dtype=jnp.float32)

    # xavier_uniform_-style deterministic init for weight (fan_in=FIN, fan_out=FOUT).
    bound = (6.0 / (FIN + FOUT)) ** 0.5
    weight = jax.random.uniform(kw, (FIN, FOUT), dtype=jnp.float32,
                                minval=-bound, maxval=bound)

    # BatchNorm1d / LayerNorm default affine params.
    bn_gamma = jnp.ones((1, FOUT), jnp.float32)
    bn_beta = jnp.zeros((1, FOUT), jnp.float32)
    ln_gamma = jnp.ones((1, FOUT), jnp.float32)
    ln_beta = jnp.zeros((1, FOUT), jnp.float32)

    out = gcn_layer(x, adj, weight, bn_gamma, bn_beta, ln_gamma, ln_beta)
    jax.block_until_ready(out)

    ref = _reference(x, adj, weight, bn_gamma, bn_beta, ln_gamma, ln_beta)
    assert out.shape == (B, N, FOUT)
    assert jnp.allclose(out, ref, atol=2e-4, rtol=2e-4), "mismatch vs JAX reference"

    print("KERNEL_OK")
</pallas_src>

<mosaic_0001>
module attributes {stable_mosaic.version = 11 : i64} {
  func.func @_gcn_matmul_kernel(%arg0: i32, %arg1: memref<1x16x8xf32, #tpu.memory_space<vmem>>, %arg2: memref<1x16x16xf32, #tpu.memory_space<vmem>>, %arg3: memref<8x32xf32, #tpu.memory_space<vmem>>, %arg4: memref<1x16x32xf32, #tpu.memory_space<vmem>>, %arg5: memref<1x1x32xf32, #tpu.memory_space<vmem>>, %arg6: memref<1x1x32xf32, #tpu.memory_space<vmem>>) attributes {dimension_semantics = [#tpu.dimension_semantics<parallel>], iteration_bounds = array<i64: 2>, scalar_prefetch = 0 : i64, scratch_operands = 0 : i64, tpu.core_type = #tpu.core_type<tc>, window_params = [{transform_indices = @transform_0, window_bounds = array<i64: 1, 16, 8>}, {transform_indices = @transform_1, window_bounds = array<i64: 1, 16, 16>}, {pipeline_mode = #tpu.pipeline_mode<synchronous>, transform_indices = @transform_2, window_bounds = array<i64: 8, 32>}, {transform_indices = @transform_3, window_bounds = array<i64: 1, 16, 32>}, {transform_indices = @transform_4, window_bounds = array<i64: 1, 1, 32>}, {transform_indices = @transform_5, window_bounds = array<i64: 1, 1, 32>}]} {
    %c0 = arith.constant 0 : index
    %c0_0 = arith.constant 0 : index
    %c0_1 = arith.constant 0 : index
    %0 = vector.load %arg1[%c0, %c0_0, %c0_1] : memref<1x16x8xf32, #tpu.memory_space<vmem>>, vector<1x16x8xf32>
    %1 = vector.shape_cast %0 : vector<1x16x8xf32> to vector<16x8xf32>
    %c0_2 = arith.constant 0 : index
    %c0_3 = arith.constant 0 : index
    %c0_4 = arith.constant 0 : index
    %2 = vector.load %arg2[%c0_2, %c0_3, %c0_4] : memref<1x16x16xf32, #tpu.memory_space<vmem>>, vector<1x16x16xf32>
    %3 = vector.shape_cast %2 : vector<1x16x16xf32> to vector<16x16xf32>
    %c0_5 = arith.constant 0 : index
    %c0_6 = arith.constant 0 : index
    %4 = vector.load %arg3[%c0_5, %c0_6] : memref<8x32xf32, #tpu.memory_space<vmem>>, vector<8x32xf32>
    %cst = arith.constant dense<0.000000e+00> : vector<16xf32>
    %5 = vector.multi_reduction <add>, %3, %cst [1] : vector<16x16xf32> to vector<16xf32>
    %6 = vector.shape_cast %5 : vector<16xf32> to vector<16x1xf32>
    %cst_7 = arith.constant 0.000000e+00 : f32
    %7 = vector.broadcast %cst_7 : f32 to vector<16x1xf32>
    %8 = arith.cmpf ogt, %6, %7 : vector<16x1xf32>
    %9 = math.rsqrt %6 : vector<16x1xf32>
    %cst_8 = arith.constant 0.000000e+00 : f32
    %10 = vector.broadcast %cst_8 : f32 to vector<16x1xf32>
    %11 = arith.select %8, %9, %10 : vector<16x1xi1>, vector<16x1xf32>
    %12 = vector.broadcast %11 : vector<16x1xf32> to vector<16x8xf32>
    %13 = arith.mulf %1, %12 : vector<16x8xf32>
    %cst_9 = arith.constant dense<0.000000e+00> : vector<16x8xf32>
    %14 = tpu.matmul %3, %13, %cst_9 {dimension_numbers = #tpu.dot_dimension_numbers<[1], [0], [0], [1], [0, 0, 1, 1], [], []>} : vector<16x16xf32>, vector<16x8xf32>, vector<16x8xf32> -> vector<16x8xf32>
    %15 = vector.broadcast %11 : vector<16x1xf32> to vector<16x8xf32>
    %16 = arith.mulf %14, %15 : vector<16x8xf32>
    %cst_10 = arith.constant dense<0.000000e+00> : vector<16x32xf32>
    %17 = tpu.matmul %16, %4, %cst_10 {dimension_numbers = #tpu.dot_dimension_numbers<[1], [0], [0], [1], [0, 0, 1, 1], [], []>} : vector<16x8xf32>, vector<8x32xf32>, vector<16x32xf32> -> vector<16x32xf32>
    %c0_11 = arith.constant 0 : index
    %c0_12 = arith.constant 0 : index
    %c0_13 = arith.constant 0 : index
    %18 = vector.load %arg4[%c0_11, %c0_12, %c0_13] : memref<1x16x32xf32, #tpu.memory_space<vmem>>, vector<1x16x32xf32>
    %19 = vector.shape_cast %18 : vector<1x16x32xf32> to vector<16x32xf32>
    %20 = vector.shape_cast %17 : vector<16x32xf32> to vector<1x16x32xf32>
    tpu.vector_store %arg4[%c0_11, %c0_12, %c0_13], %20 {strides = array<i32>} : memref<1x16x32xf32, #tpu.memory_space<vmem>>, vector<1x16x32xf32>,
    %cst_14 = arith.constant dense<0.000000e+00> : vector<32xf32>
    %21 = vector.multi_reduction <add>, %17, %cst_14 [0] : vector<16x32xf32> to vector<32xf32>
    %22 = vector.shape_cast %21 : vector<32xf32> to vector<1x32xf32>
    %c0_15 = arith.constant 0 : index
    %c0_16 = arith.constant 0 : index
    %c0_17 = arith.constant 0 : index
    %23 = vector.load %arg5[%c0_15, %c0_16, %c0_17] : memref<1x1x32xf32, #tpu.memory_space<vmem>>, vector<1x1x32xf32>
    %24 = vector.shape_cast %23 : vector<1x1x32xf32> to vector<1x32xf32>
    %25 = vector.shape_cast %22 : vector<1x32xf32> to vector<1x1x32xf32>
    tpu.vector_store %arg5[%c0_15, %c0_16, %c0_17], %25 {strides = array<i32>} : memref<1x1x32xf32, #tpu.memory_space<vmem>>, vector<1x1x32xf32>,
    %26 = arith.mulf %17, %17 : vector<16x32xf32>
    %cst_18 = arith.constant dense<0.000000e+00> : vector<32xf32>
    %27 = vector.multi_reduction <add>, %26, %cst_18 [0] : vector<16x32xf32> to vector<32xf32>
    %28 = vector.shape_cast %27 : vector<32xf32> to vector<1x32xf32>
    %c0_19 = arith.constant 0 : index
    %c0_20 = arith.constant 0 : index
    %c0_21 = arith.constant 0 : index
    %29 = vector.load %arg6[%c0_19, %c0_20, %c0_21] : memref<1x1x32xf32, #tpu.memory_space<vmem>>, vector<1x1x32xf32>
    %30 = vector.shape_cast %29 : vector<1x1x32xf32> to vector<1x32xf32>
    %31 = vector.shape_cast %28 : vector<1x32xf32> to vector<1x1x32xf32>
    tpu.vector_store %arg6[%c0_19, %c0_20, %c0_21], %31 {strides = array<i32>} : memref<1x1x32xf32, #tpu.memory_space<vmem>>, vector<1x1x32xf32>,
    return
  }
  func.func @transform_0(%arg0: i32) -> (i32, i32, i32) {
    %c0_i32 = arith.constant 0 : i32
    %c0_i32_0 = arith.constant 0 : i32
    %c0_i32_1 = arith.constant 0 : i32
    return %arg0, %c0_i32, %c0_i32_0 : i32, i32, i32
  }
  func.func @transform_1(%arg0: i32) -> (i32, i32, i32) {
    %c0_i32 = arith.constant 0 : i32
    %c0_i32_0 = arith.constant 0 : i32
    %c0_i32_1 = arith.constant 0 : i32
    return %arg0, %c0_i32, %c0_i32_0 : i32, i32, i32
  }
  func.func @transform_2(%arg0: i32) -> (i32, i32) {
    %c0_i32 = arith.constant 0 : i32
    %c0_i32_0 = arith.constant 0 : i32
    %c0_i32_1 = arith.constant 0 : i32
    return %c0_i32, %c0_i32_0 : i32, i32
  }
  func.func @transform_3(%arg0: i32) -> (i32, i32, i32) {
    %c0_i32 = arith.constant 0 : i32
    %c0_i32_0 = arith.constant 0 : i32
    %c0_i32_1 = arith.constant 0 : i32
    return %arg0, %c0_i32, %c0_i32_0 : i32, i32, i32
  }
  func.func @transform_4(%arg0: i32) -> (i32, i32, i32) {
    %c0_i32 = arith.constant 0 : i32
    %c0_i32_0 = arith.constant 0 : i32
    %c0_i32_1 = arith.constant 0 : i32
    return %arg0, %c0_i32, %c0_i32_0 : i32, i32, i32
  }
  func.func @transform_5(%arg0: i32) -> (i32, i32, i32) {
    %c0_i32 = arith.constant 0 : i32
    %c0_i32_0 = arith.constant 0 : i32
    %c0_i32_1 = arith.constant 0 : i32
    return %arg0, %c0_i32, %c0_i32_0 : i32, i32, i32
  }
}

</mosaic_0001>

<llo_original>
// kernel: tpu_custom_call.1
$region0: #{tpu_custom_call.1}
  #allocation0 [shape = 'u32[]', space=smem, size = 0x4, offset = 0x4, fixed_abs, tag = 'smem constant byte address 0x4 - core index']
  #allocation1 [shape = 'u32[144,128]{1,0:T(1,128)}', space=vmem, size = 0x12000, scoped, tag = 'internal scratch']
  %s0 = inlined_call_operand.vmem [shape: f32[2,16,8], index: 0, kind: input, shape index: {}]
  %s1 = inlined_call_operand.vmem [shape: f32[2,16,16], index: 1, kind: input, shape index: {}]
  %s2 = inlined_call_operand.vmem [shape: f32[8,32], index: 2, kind: input, shape index: {}]
  %s3 = inlined_call_operand.hbm [shape: f32[2,16,32], index: 3, kind: output, shape index: {0}]
  %s4 = inlined_call_operand.hbm [shape: f32[2,1,32], index: 4, kind: output, shape index: {1}]
  %s5 = inlined_call_operand.hbm [shape: f32[2,1,32], index: 5, kind: output, shape index: {2}]
  %6 = xla_tuple %s3, %s4, %s5
  %s7 = sld [smem:[#allocation0]]
  $region61: #{tpu_custom_call.1} parent=0
    _
  %s9 = ssub.s32 1, %s7
  %s10 = scalar_select 0, %s9, %s7
  $region1: #{tpu_custom_call.1} parent=0
    #allocation2 [shape = 'u8[16384]{0}', space=vmem, size = 0x4000, scoped, tag = 'output window, operand 0']
    #allocation3 [shape = 's32[2]{0}', space=sflag, size = 0x8, scoped, tag = 'scoped memory for tpu_custom_call.1']
    #allocation4 [shape = 'u8[1024]{0}', space=vmem, size = 0x400, scoped, tag = 'output window, operand 1']
    #allocation5 [shape = 's32[2]{0}', space=sflag, size = 0x8, scoped, tag = 'scoped memory for tpu_custom_call.1']
    #allocation6 [shape = 'u8[1024]{0}', space=vmem, size = 0x400, scoped, tag = 'output window, operand 2']
    %11 = vsyncpa [#allocation3], 0
    %s12 = scalar_lea.sflag [#allocation3], 1
    %13 = vsyncpa %s12, 0
    %14 = vsyncpa [#allocation5], 0
    %s15 = scalar_lea.sflag [#allocation5], 1
    %16 = vsyncpa %s15, 0
    loop: start=0, step=1, limit=4
    $region2: #{tpu_custom_call.1} parent=1 // loop_pre_header
      _
    $region3: #{tpu_custom_call.1} parent=1 // loop_header
      %s18 = sphi 0, %s22
      %p19 = scmp.ge.s32.totalorder %s18, 4
      %s28 = sphi 0, %s30
      %s31 = sphi 0, %s28
      %s32 = sphi 0, %s31
      %s48 = sphi 0, %s32
      %s54 = sphi 0, %s56
      %s57 = sphi 0, %s54
      %s58 = sphi 0, %s57
      %s74 = sphi 0, %s58
      %s78 = sphi 0, %s78
      %s80 = sphi 0, %s78
      %s81 = sphi 0, %s80
      %s95 = sphi 0, %s81
      %s101 = sphi 0, %s103
      %s104 = sphi 0, %s101
      %s105 = sphi 0, %s104
      %s121 = sphi 0, %s105
      %s127 = sphi 0, %s129
      %s130 = sphi 0, %s127
      %s131 = sphi 0, %s130
      %s147 = sphi 0, %s131
      %s153 = sphi 0, %s155
      %s156 = sphi 0, %s153
      %s157 = sphi 0, %s156
      %s173 = sphi 0, %s157
    $region4: #{tpu_custom_call.1} parent=1 // loop_header_branch
      %21 = sbr.rel (%p19) target = $region8
    $region5: #{tpu_custom_call.1} parent=1 // loop_body
      %s23 = ssub.s32 %s18, 1
      %s24 = ssub.s32 %s18, 2
      %s25 = sadd.s32 %s18, 1
      %s26 = ssub.s32 %s18, %s25
      %p27 = scmp.eq.s32.totalorder %s26, 0
      %s29 = sadd.s32 %s28, 1
      %s30 = scalar_select %p27, %s28, %s29
      %p33 = pneg %p27
      %p34 = scmp.eq.s32.totalorder %s18, 1
      %p35 = por %p33, %p34
      %p36 = scmp.ne.s32.totalorder %s28, %s31
      %p37 = scmp.eq.s32.totalorder %s18, 0
      %p38 = por %p36, %p37
      %p39 = scmp.ne.s32.totalorder %s28, %s31
      %p40 = scmp.eq.s32.totalorder %s23, 1
      %p41 = por %p39, %p40
      %p42 = scmp.ne.s32.totalorder %s31, %s32
      %p43 = scmp.eq.s32.totalorder %s23, 0
      %p44 = por %p42, %p43
      %p45 = scmp.ne.s32.totalorder %s31, %s32
      %p46 = scmp.eq.s32.totalorder %s24, 1
      %p47 = por %p45, %p46
      %p49 = scmp.ne.s32.totalorder %s32, %s48
      %p50 = scmp.eq.s32.totalorder %s24, 0
      %p51 = por %p49, %p50
      %s52 = ssub.s32 %s18, %s25
      %p53 = scmp.eq.s32.totalorder %s52, 0
      %s55 = sadd.s32 %s54, 1
      %s56 = scalar_select %p53, %s54, %s55
      %p59 = pneg %p53
      %p60 = scmp.eq.s32.totalorder %s18, 1
      %p61 = por %p59, %p60
      %p62 = scmp.ne.s32.totalorder %s54, %s57
      %p63 = scmp.eq.s32.totalorder %s18, 0
      %p64 = por %p62, %p63
      %p65 = scmp.ne.s32.totalorder %s54, %s57
      %p66 = scmp.eq.s32.totalorder %s23, 1
      %p67 = por %p65, %p66
      %p68 = scmp.ne.s32.totalorder %s57, %s58
      %p69 = scmp.eq.s32.totalorder %s23, 0
      %p70 = por %p68, %p69
      %p71 = scmp.ne.s32.totalorder %s57, %s58
      %p72 = scmp.eq.s32.totalorder %s24, 1
      %p73 = por %p71, %p72
      %p75 = scmp.ne.s32.totalorder %s58, %s74
      %p76 = scmp.eq.s32.totalorder %s24, 0
      %p77 = por %p75, %p76
      %s79 = sadd.s32 %s78, 1
      %p82 = scmp.eq.s32.totalorder %s18, 1
      %p83 = scmp.ne.s32.totalorder %s78, %s80
      %p84 = scmp.eq.s32.totalorder %s18, 0
      %p85 = por %p83, %p84
      %p86 = scmp.ne.s32.totalorder %s78, %s80
      %p87 = scmp.eq.s32.totalorder %s23, 1
      %p88 = por %p86, %p87
      %p89 = scmp.ne.s32.totalorder %s80, %s81
      %p90 = scmp.eq.s32.totalorder %s23, 0
      %p91 = por %p89, %p90
      %p92 = scmp.ne.s32.totalorder %s80, %s81
      %p93 = scmp.eq.s32.totalorder %s24, 1
      %p94 = por %p92, %p93
      %p96 = scmp.ne.s32.totalorder %s81, %s95
      %p97 = scmp.eq.s32.totalorder %s24, 0
      %p98 = por %p96, %p97
      %s99 = ssub.s32 %s18, %s25
      %p100 = scmp.eq.s32.totalorder %s99, 0
      %s102 = sadd.s32 %s101, 1
      %s103 = scalar_select %p100, %s101, %s102
      %p106 = pneg %p100
      %p107 = scmp.eq.s32.totalorder %s18, 1
      %p108 = por %p106, %p107
      %p109 = scmp.ne.s32.totalorder %s101, %s104
      %p110 = scmp.eq.s32.totalorder %s18, 0
      %p111 = por %p109, %p110
      %p112 = scmp.ne.s32.totalorder %s101, %s104
      %p113 = scmp.eq.s32.totalorder %s23, 1
      %p114 = por %p112, %p113
      %p115 = scmp.ne.s32.totalorder %s104, %s105
      %p116 = scmp.eq.s32.totalorder %s23, 0
      %p117 = por %p115, %p116
      %p118 = scmp.ne.s32.totalorder %s104, %s105
      %p119 = scmp.eq.s32.totalorder %s24, 1
      %p120 = por %p118, %p119
      %p122 = scmp.ne.s32.totalorder %s105, %s121
      %p123 = scmp.eq.s32.totalorder %s24, 0
      %p124 = por %p122, %p123
      %s125 = ssub.s32 %s18, %s25
      %p126 = scmp.eq.s32.totalorder %s125, 0
      %s128 = sadd.s32 %s127, 1
      %s129 = scalar_select %p126, %s127, %s128
      %p132 = pneg %p126
      %p133 = scmp.eq.s32.totalorder %s18, 1
      %p134 = por %p132, %p133
      %p135 = scmp.ne.s32.totalorder %s127, %s130
      %p136 = scmp.eq.s32.totalorder %s18, 0
      %p137 = por %p135, %p136
      %p138 = scmp.ne.s32.totalorder %s127, %s130
      %p139 = scmp.eq.s32.totalorder %s23, 1
      %p140 = por %p138, %p139
      %p141 = scmp.ne.s32.totalorder %s130, %s131
      %p142 = scmp.eq.s32.totalorder %s23, 0
      %p143 = por %p141, %p142
      %p144 = scmp.ne.s32.totalorder %s130, %s131
      %p145 = scmp.eq.s32.totalorder %s24, 1
      %p146 = por %p144, %p145
      %p148 = scmp.ne.s32.totalorder %s131, %s147
      %p149 = scmp.eq.s32.totalorder %s24, 0
      %p150 = por %p148, %p149
      %s151 = ssub.s32 %s18, %s25
      %p152 = scmp.eq.s32.totalorder %s151, 0
      %s154 = sadd.s32 %s153, 1
      %s155 = scalar_select %p152, %s153, %s154
      %p158 = pneg %p152
      %p159 = scmp.eq.s32.totalorder %s18, 1
      %p160 = por %p158, %p159
      %p161 = scmp.ne.s32.totalorder %s153, %s156
      %p162 = scmp.eq.s32.totalorder %s18, 0
      %p163 = por %p161, %p162
      %p164 = scmp.ne.s32.totalorder %s153, %s156
      %p165 = scmp.eq.s32.totalorder %s23, 1
      %p166 = por %p164, %p165
      %p167 = scmp.ne.s32.totalorder %s156, %s157
      %p168 = scmp.eq.s32.totalorder %s23, 0
      %p169 = por %p167, %p168
      %p170 = scmp.ne.s32.totalorder %s156, %s157
      %p171 = scmp.eq.s32.totalorder %s24, 1
      %p172 = por %p170, %p171
      %p174 = scmp.ne.s32.totalorder %s157, %s173
      %p175 = scmp.eq.s32.totalorder %s24, 0
      %p176 = por %p174, %p175
      %p177 = scmp.le.s32.totalorder 1, %s18
      %p178 = scmp.lt.s32.totalorder %s18, 3
      %p179 = pnand %p177, %p178
      %p180 = pneg %p179
      // Predicated region
      $region9: #{tpu_custom_call.1} parent=5 // pred_check
        _
      $region10: #{tpu_custom_call.1} parent=5 // pred_check_branch
        %182 = sbr.rel (%p179) target = $region12
      $region11: #{tpu_custom_call.1} parent=5 // pred_region
        %s183 = ssub.s32 %s18, 1
        // Predicated region
        $region13: #{tpu_custom_call.1} parent=11 // pred_check
          %p184 = pneg %p91
        $region14: #{tpu_custom_call.1} parent=11 // pred_check_branch
          %186 = sbr.rel (%p184) target = $region16
        $region15: #{tpu_custom_call.1} parent=11 // pred_region
          _
        $region16: #{tpu_custom_call.1} parent=11 // pred_fallthru
          _
      $region12: #{tpu_custom_call.1} parent=5 // pred_fallthru
        _
      %p187 = scmp.lt.s32.totalorder %s18, 2
      // Predicated region
      $region17: #{tpu_custom_call.1} parent=5 // pred_check
        %p188 = pneg %p187
      $region18: #{tpu_custom_call.1} parent=5 // pred_check_branch
        %190 = sbr.rel (%p188) target = $region20
      $region19: #{tpu_custom_call.1} parent=5 // pred_region
        // Predicated region
        $region21: #{tpu_custom_call.1} parent=19 // pred_check
          %p191 = pneg %p38
        $region22: #{tpu_custom_call.1} parent=19 // pred_check_branch
          %193 = sbr.rel (%p191) target = $region24
        $region23: #{tpu_custom_call.1} parent=19 // pred_region
          %p194 = scmp.lt.s32.totalorder %s18, 1
          %s195 = scalar_select %p194, %s18, 1
          %s196 = smul.addr %s195, 2
          %s197 = smul.addr %s196, 8
          %s198 = scalar_lea.vmem %s0, %s197
        $region24: #{tpu_custom_call.1} parent=19 // pred_fallthru
          _
        // Predicated region
        $region25: #{tpu_custom_call.1} parent=19 // pred_check
          %p199 = pneg %p64
        $region26: #{tpu_custom_call.1} parent=19 // pred_check_branch
          %201 = sbr.rel (%p199) target = $region28
        $region27: #{tpu_custom_call.1} parent=19 // pred_region
          %p202 = scmp.lt.s32.totalorder %s18, 1
          %s203 = scalar_select %p202, %s18, 1
          %s204 = smul.addr %s203, 2
          %s205 = smul.addr %s204, 8
          %s206 = scalar_lea.vmem %s1, %s205
        $region28: #{tpu_custom_call.1} parent=19 // pred_fallthru
          _
      $region20: #{tpu_custom_call.1} parent=5 // pred_fallthru
        _
      %p207 = scmp.le.s32.totalorder 1, %s18
      %p208 = scmp.lt.s32.totalorder %s18, 3
      %p209 = pnand %p207, %p208
      %p210 = pneg %p209
      // Predicated region
      $region29: #{tpu_custom_call.1} parent=5 // pred_check
        _
      $region30: #{tpu_custom_call.1} parent=5 // pred_check_branch
        %212 = sbr.rel (%p209) target = $region32
      $region31: #{tpu_custom_call.1} parent=5 // pred_region
        %s213 = ssub.s32 %s18, 1
        %p214 = scmp.lt.s32.totalorder %s23, 1
        %s215 = scalar_select %p214, %s23, 1
        %s216 = smul.addr %s215, 2
        %s217 = smul.addr %s216, 8
        %s218 = scalar_lea.vmem %s0, %s217
        %p219 = pneg %p44
        %p220 = pneg %p41
        %p221 = scmp.lt.s32.totalorder %s23, 1
        %s222 = scalar_select %p221, %s23, 1
        %s223 = smul.addr %s222, 2
        %s224 = smul.addr %s223, 8
        %s225 = scalar_lea.vmem %s1, %s224
        %p226 = pneg %p70
        %p227 = pneg %p67
        %p228 = pneg %p91
        %p229 = pneg %p88
        %p230 = pneg %p117
        %p231 = pneg %p114
        %s232 = sand.u32 %s104, 1
        %s233 = scalar_lea.sflag [#allocation3], %s232
        %s234 = sand.u32 %s104, 1
        %s235 = smul.addr %s234, 16
        %s236 = scalar_lea.vmem [#allocation2], %s235
        %p237 = pneg %p143
        %p238 = pneg %p140
        %s239 = sand.u32 %s23, 1
        %s240 = scalar_lea.sflag [#allocation5], %s239
        %s241 = sand.u32 %s130, 1
        %s242 = scalar_lea.vmem [#allocation4], %s241
        %p243 = pneg %p169
        %p244 = pneg %p166
        %s245 = sand.u32 %s23, 1
        %s246 = scalar_lea.sflag [#allocation5], %s245
        %s247 = sand.u32 %s156, 1
        %s248 = scalar_lea.vmem [#allocation6], %s247
        %p249 = scmp.lt.s32.totalorder %s23, 1
        %s250 = scalar_select %p249, %s23, 1
        %s251 = smul.addr %s250, 2
        %s252 = smul.addr %s251, 8
        %s253 = scalar_lea.vmem %s0, %s252
        %p254 = scmp.lt.s32.totalorder %s23, 1
        %s255 = scalar_select %p254, %s23, 1
        %s256 = smul.addr %s255, 2
        %s257 = smul.addr %s256, 8
        %s258 = scalar_lea.vmem %s1, %s257
        %v259 = vld [vmem:[%s253] sm:$0xff]
        %v260 = vld [vmem:[%s253 + $0x8] sm:$0xff]
        %v261 = vld [vmem:[%s258] sm:$0xff]
        %v262 = vld [vmem:[%s258 + $0x8] sm:$0xff]
        %v263 = vld [vmem:[%s2] sm:$0xff]
        %vm264 = vcmask 130048
        %v265 = vsel %vm264, %v261, 0.0
        %266 = vadd.xlane.f32.xlu0 %v265
        %v267 = vpop.xlane.xlu0 %266
        %v268 = vsel %vm264, %v262, 0.0
        %269 = vadd.xlane.f32.xlu0 %v268
        %v270 = vpop.xlane.xlu0 %269
        %vm271 = vcmp.gt.f32.partialorder %v267, 0.0
        %vm272 = vcmp.gt.f32.partialorder %v270, 0.0
        %v273 = vrsqrt.pop %v267
        %v274 = vrsqrt.pop %v270
        %v275 = vsel %vm271, %v273, 0.0
        %v276 = vsel %vm272, %v274, 0.0
        %v277 = vmul.f32 %v259, %v275
        %v278 = vmul.f32 %v260, %v276
        %v280 = vsel %vm264, %v261, 0
        %v283 = vsel %vm264, %v262, 0
        %285 = vmatprep.subr.mxu0 0.0
        %286 = vmatpush1.msra.mxu0 %v277
        %287 = vmatprep.subr.mxu0 0.0
        %288 = vmatpush1.msra.mxu0 %v278
        %289 = vmatprep.subr.mxu0 0.0
        %290 = vmatpush1.msra.mxu0 0.0
        %291 = vmatprep.subr.mxu0 0.0
        %292 = vmatpush1.msra.mxu0 0.0
        %293 = vmatprep.subr.mxu0 0.0
        %294 = vmatpush1.msra.mxu0 0.0
        %295 = vmatprep.subr.mxu0 0.0
        %296 = vmatpush1.msra.mxu0 0.0
        %297 = vmatprep.subr.mxu0 0.0
        %298 = vmatpush1.msra.mxu0 0.0
        %299 = vmatprep.subr.mxu0 0.0
        %300 = vmatpush1.msra.mxu0 0.0
        %301 = vmatprep.subr.mxu0 0.0
        %302 = vmatpush1.msra.mxu0 0.0
        %303 = vmatprep.subr.mxu0 0.0
        %304 = vmatpush1.msra.mxu0 0.0
        %305 = vmatprep.subr.mxu0 0.0
        %306 = vmatpush1.msra.mxu0 0.0
        %307 = vmatprep.subr.mxu0 0.0
        %308 = vmatpush1.msra.mxu0 0.0
        %309 = vmatprep.subr.mxu0 0.0
        %310 = vmatpush1.msra.mxu0 0.0
        %311 = vmatprep.subr.mxu0 0.0
        %312 = vmatpush1.msra.mxu0 0.0
        %313 = vmatprep.subr.mxu0 0.0
        %314 = vmatpush1.msra.mxu0 0.0
        %315 = vmatprep.subr.mxu0 0.0
        %316 = vmatpush1.msra.mxu0 0.0
        %317 = vmatprep.subr.mxu0 0.0
        %318 = vmatpush1.msra.mxu0 0.0
        %319 = vmatprep.subr.mxu0 0.0
        %320 = vmatpush1.msra.mxu0 0.0
        %321 = vmatprep.subr.mxu0 0.0
        %322 = vmatpush1.msra.mxu0 0.0
        %323 = vmatprep.subr.mxu0 0.0
        %324 = vmatpush1.msra.mxu0 0.0
        %325 = vmatprep.subr.mxu0 0.0
        %326 = vmatpush1.msra.mxu0 0.0
        %327 = vmatprep.subr.mxu0 0.0
        %328 = vmatpush1.msra.mxu0 0.0
        %329 = vmatprep.subr.mxu0 0.0
        %330 = vmatpush1.msra.mxu0 0.0
        %331 = vmatprep.subr.mxu0 0.0
        %332 = vmatpush1.msra.mxu0 0.0
        %333 = vmatprep.subr.mxu0 0.0
        %334 = vmatpush1.msra.mxu0 0.0
        %335 = vmatprep.subr.mxu0 0.0
        %336 = vmatpush1.msra.mxu0 0.0
        %337 = vmatprep.subr.mxu0 0.0
        %338 = vmatpush1.msra.mxu0 0.0
        %339 = vmatprep.subr.mxu0 0.0
        %340 = vmatpush1.msra.mxu0 0.0
        %341 = vmatprep.subr.mxu0 0.0
        %342 = vmatpush1.msra.mxu0 0.0
        %343 = vmatprep.subr.mxu0 0.0
        %344 = vmatpush1.msra.mxu0 0.0
        %345 = vmatprep.subr.mxu0 0.0
        %346 = vmatpush1.msra.mxu0 0.0
        %347 = vmatprep.subr.mxu0 0.0
        %348 = vmatpush1.msra.mxu0 0.0
        %349 = vmatprep.mubr.f32.mxu0 0.0
        %350 = vmatmul.mubr.f32.gmra.mrb[0].mxu0 %v280
        %v351 = vpop.f32.mrb[0].mxu0
        %v352 = vadd.f32 0.0, %v351
        %v353 = vpop.f32.mrb[0].mxu0
        %354 = vmatprep.mubr.f32.mxu0 0.0
        %355 = vmatmul.mubr.f32.gmra.mrb[0].mxu0 %v283
        %v356 = vpop.f32.mrb[0].mxu0
        %v357 = vadd.f32 0.0, %v356
        %v358 = vpop.f32.mrb[0].mxu0
        %359 = vdwg.mxu0
        %v360 = vmul.f32 %v352, %v275
        %v361 = vmul.f32 %v357, %v276
        %vm362 = vcmask 64512
        %v364 = vsel %vm362, %v360, 0
        %v367 = vsel %vm362, %v361, 0
        %369 = vmatprep.subr.mxu0 0.0
        %370 = vmatpush1.msra.mxu0 %v263
        %371 = vmatprep.subr.mxu0 0.0
        %372 = vmatpush1.msra.mxu0 0.0
        %373 = vmatprep.subr.mxu0 0.0
        %374 = vmatpush1.msra.mxu0 0.0
        %375 = vmatprep.subr.mxu0 0.0
        %376 = vmatpush1.msra.mxu0 0.0
        %377 = vmatprep.subr.mxu0 0.0
        %378 = vmatpush1.msra.mxu0 0.0
        %379 = vmatprep.subr.mxu0 0.0
        %380 = vmatpush1.msra.mxu0 0.0
        %381 = vmatprep.subr.mxu0 0.0
        %382 = vmatpush1.msra.mxu0 0.0
        %383 = vmatprep.subr.mxu0 0.0
        %384 = vmatpush1.msra.mxu0 0.0
        %385 = vmatprep.subr.mxu0 0.0
        %386 = vmatpush1.msra.mxu0 0.0
        %387 = vmatprep.subr.mxu0 0.0
        %388 = vmatpush1.msra.mxu0 0.0
        %389 = vmatprep.subr.mxu0 0.0
        %390 = vmatpush1.msra.mxu0 0.0
        %391 = vmatprep.subr.mxu0 0.0
        %392 = vmatpush1.msra.mxu0 0.0
        %393 = vmatprep.subr.mxu0 0.0
        %394 = vmatpush1.msra.mxu0 0.0
        %395 = vmatprep.subr.mxu0 0.0
        %396 = vmatpush1.msra.mxu0 0.0
        %397 = vmatprep.subr.mxu0 0.0
        %398 = vmatpush1.msra.mxu0 0.0
        %399 = vmatprep.subr.mxu0 0.0
        %400 = vmatpush1.msra.mxu0 0.0
        %401 = vmatprep.subr.mxu0 0.0
        %402 = vmatpush1.msra.mxu0 0.0
        %403 = vmatprep.subr.mxu0 0.0
        %404 = vmatpush1.msra.mxu0 0.0
        %405 = vmatprep.subr.mxu0 0.0
        %406 = vmatpush1.msra.mxu0 0.0
        %407 = vmatprep.subr.mxu0 0.0
        %408 = vmatpush1.msra.mxu0 0.0
        %409 = vmatprep.subr.mxu0 0.0
        %410 = vmatpush1.msra.mxu0 0.0
        %411 = vmatprep.subr.mxu0 0.0
        %412 = vmatpush1.msra.mxu0 0.0
        %413 = vmatprep.subr.mxu0 0.0
        %414 = vmatpush1.msra.mxu0 0.0
        %415 = vmatprep.subr.mxu0 0.0
        %416 = vmatpush1.msra.mxu0 0.0
        %417 = vmatprep.subr.mxu0 0.0
        %418 = vmatpush1.msra.mxu0 0.0
        %419 = vmatprep.subr.mxu0 0.0
        %420 = vmatpush1.msra.mxu0 0.0
        %421 = vmatprep.subr.mxu0 0.0
        %422 = vmatpush1.msra.mxu0 0.0
        %423 = vmatprep.subr.mxu0 0.0
        %424 = vmatpush1.msra.mxu0 0.0
        %425 = vmatprep.subr.mxu0 0.0
        %426 = vmatpush1.msra.mxu0 0.0
        %427 = vmatprep.subr.mxu0 0.0
        %428 = vmatpush1.msra.mxu0 0.0
        %429 = vmatprep.subr.mxu0 0.0
        %430 = vmatpush1.msra.mxu0 0.0
        %431 = vmatprep.subr.mxu0 0.0
        %432 = vmatpush1.msra.mxu0 0.0
        %433 = vmatprep.mubr.f32.mxu0 0.0
        %434 = vmatmul.mubr.f32.gmra.mrb[0].mxu0 %v364
        %v435 = vpop.f32.mrb[0].mxu0
        %v436 = vadd.f32 0.0, %v435
        %v437 = vpop.f32.mrb[0].mxu0
        %438 = vmatprep.mubr.f32.mxu0 0.0
        %439 = vmatmul.mubr.f32.gmra.mrb[0].mxu0 %v367
        %v440 = vpop.f32.mrb[0].mxu0
        %v441 = vadd.f32 0.0, %v440
        %v442 = vpop.f32.mrb[0].mxu0
        %443 = vdwg.mxu0
        %vm444 = vcmask 261120
        %445 = vst.msk [vmem:[%s236] sm:$0xff] %vm444, %v436
        %446 = vst.msk [vmem:[%s236 + $0x8] sm:$0xff] %vm444, %v441
        %v447 = vsel %vm444, %v436, 0.0
        %v448 = vsel %vm444, %v441, 0.0
        %v449 = vadd.f32 %v447, %v448
        %v450 = vrot.slane %v449, 4
        %v451 = vadd.f32 %v449, %v450
        %v452 = vrot.slane %v451, 2
        %v453 = vadd.f32 %v451, %v452
        %v454 = vrot.slane %v453, 1
        %v455 = vadd.f32 %v453, %v454
        %vm456 = vcmask 253952
        %457 = vst.msk [vmem:[%s242] sm:$0x1] %vm456, %v455
        %v458 = vmul.f32 %v436, %v436
        %v459 = vmul.f32 %v441, %v441
        %v460 = vsel %vm444, %v458, 0.0
        %v461 = vsel %vm444, %v459, 0.0
        %v462 = vadd.f32 %v460, %v461
        %v463 = vrot.slane %v462, 4
        %v464 = vadd.f32 %v462, %v463
        %v465 = vrot.slane %v464, 2
        %v466 = vadd.f32 %v464, %v465
        %v467 = vrot.slane %v466, 1
        %v468 = vadd.f32 %v466, %v467
        %469 = vst.msk [vmem:[%s248] sm:$0x1] %vm456, %v468
        %s470 = sand.u32 %s104, 1
        %s471 = scalar_lea.sflag [#allocation3], %s470
        %s472 = sand.u32 %s104, 1
        %s473 = smul.addr %s472, 16
        %s474 = scalar_lea.vmem [#allocation2], %s473
        %s475 = sand.u32 %s23, 1
        %s476 = scalar_lea.sflag [#allocation5], %s475
        %s477 = sand.u32 %s130, 1
        %s478 = scalar_lea.vmem [#allocation4], %s477
        %s479 = sand.u32 %s23, 1
        %s480 = scalar_lea.sflag [#allocation5], %s479
        %s481 = sand.u32 %s156, 1
        %s482 = scalar_lea.vmem [#allocation6], %s481
        // Predicated region
        $region33: #{tpu_custom_call.1} parent=31 // pred_check
          %p483 = pneg %p114
        $region34: #{tpu_custom_call.1} parent=31 // pred_check_branch
          %485 = sbr.rel (%p483) target = $region36
        $region35: #{tpu_custom_call.1} parent=31 // pred_region
          %s487 = ssub.s32 256, 256
          %488 = vsyncadd %s471, %s487
          %s489 = smul.addr %s23, 2
          %s490 = smul.addr %s489, 128
          %s491 = scalar_lea.hbm %s3, %s490
          %s492 = sshll.u32 %s474, 4
          %s493 = int_to_ptr.vmem [resolvable:$true] %s492
          %498 = dma.vmem_to_hbm [thread:$0]  %s493, 256, %s491, %s471, 128, 128, 8
        $region36: #{tpu_custom_call.1} parent=31 // pred_fallthru
          _
        // Predicated region
        $region37: #{tpu_custom_call.1} parent=31 // pred_check
          %p499 = pneg %p140
        $region38: #{tpu_custom_call.1} parent=31 // pred_check_branch
          %501 = sbr.rel (%p499) target = $region40
        $region39: #{tpu_custom_call.1} parent=31 // pred_region
          %s503 = ssub.s32 16, 16
          %504 = vsyncadd %s476, %s503
          %s505 = smul.addr %s23, 16
          %s506 = scalar_lea.hbm %s4, %s505
          %s508 = sshll.u32 %s478, 4
          %s509 = int_to_ptr.vmem [resolvable:$true] %s508
          %511 = dma.vmem_to_hbm [thread:$0]  %s509, 16, %s506, %s476
        $region40: #{tpu_custom_call.1} parent=31 // pred_fallthru
          _
        // Predicated region
        $region41: #{tpu_custom_call.1} parent=31 // pred_check
          %p512 = pneg %p166
        $region42: #{tpu_custom_call.1} parent=31 // pred_check_branch
          %514 = sbr.rel (%p512) target = $region44
        $region43: #{tpu_custom_call.1} parent=31 // pred_region
          %s516 = ssub.s32 16, 16
          %517 = vsyncadd %s480, %s516
          %s518 = smul.addr %s23, 16
          %s519 = scalar_lea.hbm %s5, %s518
          %s521 = sshll.u32 %s482, 4
          %s522 = int_to_ptr.vmem [resolvable:$true] %s521
          %524 = dma.vmem_to_hbm [thread:$0]  %s522, 16, %s519, %s480
        $region44: #{tpu_custom_call.1} parent=31 // pred_fallthru
          _
      $region32: #{tpu_custom_call.1} parent=5 // pred_fallthru
        _
      %p525 = scmp.le.s32.totalorder 2, %s18
      // Predicated region
      $region45: #{tpu_custom_call.1} parent=5 // pred_check
        %p526 = pneg %p525
      $region46: #{tpu_custom_call.1} parent=5 // pred_check_branch
        %528 = sbr.rel (%p526) target = $region48
      $region47: #{tpu_custom_call.1} parent=5 // pred_region
        %s529 = ssub.s32 %s18, 2
        // Predicated region
        $region49: #{tpu_custom_call.1} parent=47 // pred_check
          %p530 = pneg %p120
        $region50: #{tpu_custom_call.1} parent=47 // pred_check_branch
          %532 = sbr.rel (%p530) target = $region52
        $region51: #{tpu_custom_call.1} parent=47 // pred_region
          %s533 = sand.u32 %s105, 1
          %s534 = scalar_lea.sflag [#allocation3], %s533
          %s535 = sand.u32 %s105, 1
          %s536 = smul.addr %s535, 16
          %s537 = scalar_lea.vmem [#allocation2], %s536
          %538 = dma.done %s534, 256
        $region52: #{tpu_custom_call.1} parent=47 // pred_fallthru
          _
        // Predicated region
        $region53: #{tpu_custom_call.1} parent=47 // pred_check
          %p539 = pneg %p146
        $region54: #{tpu_custom_call.1} parent=47 // pred_check_branch
          %541 = sbr.rel (%p539) target = $region56
        $region55: #{tpu_custom_call.1} parent=47 // pred_region
          %s542 = sand.u32 %s24, 1
          %s543 = scalar_lea.sflag [#allocation5], %s542
          %s544 = sand.u32 %s131, 1
          %s545 = scalar_lea.vmem [#allocation4], %s544
          %546 = dma.done %s543, 16
        $region56: #{tpu_custom_call.1} parent=47 // pred_fallthru
          _
        // Predicated region
        $region57: #{tpu_custom_call.1} parent=47 // pred_check
          %p547 = pneg %p172
        $region58: #{tpu_custom_call.1} parent=47 // pred_check_branch
          %549 = sbr.rel (%p547) target = $region60
        $region59: #{tpu_custom_call.1} parent=47 // pred_region
          %s550 = sand.u32 %s24, 1
          %s551 = scalar_lea.sflag [#allocation5], %s550
          %s552 = sand.u32 %s157, 1
          %s553 = scalar_lea.vmem [#allocation6], %s552
          %554 = dma.done %s551, 16
        $region60: #{tpu_custom_call.1} parent=47 // pred_fallthru
          _
      $region48: #{tpu_custom_call.1} parent=5 // pred_fallthru
        _
    $region6: #{tpu_custom_call.1} parent=1 // loop_footer
      %s22 = sadd.s32 1, %s18
    $region7: #{tpu_custom_call.1} parent=1 // loop_footer_branch
      %17 = sbr.rel target = $region3
    $region8: #{tpu_custom_call.1} parent=1 // loop_exit
      _
    %555 = vsyncpa [#allocation3], 1
    %s556 = scalar_lea.sflag [#allocation3], 1
    %557 = vsyncpa %s556, 1
    %558 = vsyncpa [#allocation5], 1
    %s559 = scalar_lea.sflag [#allocation5], 1
    %560 = vsyncpa %s559, 1

</llo_original>
